<compile_context>
chip_gen: v7x
topology: tpu7x:2x2x1
jax: 0.10.0
libtpu: 0.0.40
codegen_flags: <defaults>
</compile_context>

<pallas_src>
import functools
import math

import jax
import jax.numpy as jnp
from jax.experimental import pallas as pl
from jax.experimental.pallas import tpu as pltpu


# ---------------------------------------------------------------------------
# Generation-aware VMEM budget (128 MiB v5e/v6e, 64 MiB per TC on v7x).
# ---------------------------------------------------------------------------
def _vmem_limit_bytes():
    try:
        cap = int(pltpu.get_tpu_info().vmem_capacity_bytes)
    except Exception:
        cap = 64 << 20          # conservative fallback = v7x per-TC VMEM
    return max(16 << 20, (cap * 3) // 4)   # ~25% headroom


# ---------------------------------------------------------------------------
# Path 1: fully fused layer stack (single grid-less pallas_call, all in VMEM).
# ---------------------------------------------------------------------------
def _fused_stack_kernel(num_layers, compute_dtype, x_ref, adj_ref, *refs):
    """refs = (w0, b0, w1, b1, ..., o_ref). All whole-array VMEM blocks."""
    w_refs = refs[0:2 * num_layers:2]
    b_refs = refs[1:2 * num_layers:2]
    o_ref = refs[2 * num_layers]

    adj = adj_ref[...]                 # loaded once, reused by every layer
    h = x_ref[...]
    for w_ref, b_ref in zip(w_refs, b_refs):
        support = jnp.dot(h.astype(compute_dtype), w_ref[...],
                          preferred_element_type=jnp.float32)
        out = jnp.dot(adj, support.astype(compute_dtype),
                      preferred_element_type=jnp.float32)
        h = jnp.maximum(out + b_ref[...], 0.0)     # f32 bias + ReLU epilogue
    o_ref[...] = h.astype(o_ref.dtype)


def gcn_layer_fused(inputs, adj, weights, biases, *, compute_dtype, vmem_limit):
    n = adj.shape[0]
    f_out = weights[-1].shape[1]
    num_layers = len(weights)
    vmem_spec = pl.BlockSpec(memory_space=pltpu.MemorySpace.VMEM)

    args = [inputs.astype(compute_dtype), adj.astype(compute_dtype)]
    in_specs = [vmem_spec, vmem_spec]
    for w, b in zip(weights, biases):
        args.append(w.astype(compute_dtype))
        args.append(jnp.reshape(b, (1, -1)).astype(jnp.float32))
        in_specs.extend([vmem_spec, vmem_spec])

    return pl.pallas_call(
        functools.partial(_fused_stack_kernel, num_layers, compute_dtype),
        out_shape=jax.ShapeDtypeStruct((n, f_out), inputs.dtype),
        in_specs=in_specs,
        out_specs=vmem_spec,
        compiler_params=pltpu.CompilerParams(vmem_limit_bytes=vmem_limit),
    )(*args)


# ---------------------------------------------------------------------------
# Path 2: tiled per-layer kernels.
# ---------------------------------------------------------------------------
def _support_kernel(x_ref, w_ref, o_ref):
    """support tile = x_tile @ W  (f32 accumulation on the MXU)."""
    o_ref[...] = jnp.dot(x_ref[...], w_ref[...],
                         preferred_element_type=jnp.float32).astype(o_ref.dtype)


def _support_matmul(x, w, *, tm, compute_dtype, vmem_limit):
    """support_0 = x @ W_0 — only needed once, for the first layer."""
    n, f_in = x.shape
    f_out = w.shape[1]
    assert n % tm == 0
    return pl.pallas_call(
        _support_kernel,
        out_shape=jax.ShapeDtypeStruct((n, f_out), compute_dtype),
        grid=(n // tm,),
        in_specs=[
            pl.BlockSpec((tm, f_in), lambda i: (i, 0)),
            pl.BlockSpec((f_in, f_out), lambda i: (0, 0)),
        ],
        out_specs=pl.BlockSpec((tm, f_out), lambda i: (i, 0)),
        compiler_params=pltpu.CompilerParams(
            dimension_semantics=("parallel",),
            vmem_limit_bytes=vmem_limit),
    )(x.astype(compute_dtype), w.astype(compute_dtype))


def _adj_layer_kernel(tk, sup_resident, has_next,
                      adj_ref, sup_ref, b_ref, *refs):
    """Row tile of relu(adj @ support + b); if has_next, the next layer's
    x @ W is fused into the k==last epilogue (emits next layer's support)."""
    if has_next:
        w_next_ref, o_ref, acc_ref = refs
    else:
        o_ref, acc_ref = refs

    k = pl.program_id(1)
    if sup_resident:
        start = pl.multiple_of(k * tk, tk)
        sup_blk = sup_ref[pl.ds(start, tk), :]     # slice of the resident copy
    else:
        sup_blk = sup_ref[...]                     # streamed (tk, f) block

    prod = jnp.dot(adj_ref[...], sup_blk, preferred_element_type=jnp.float32)

    @pl.when(k == 0)
    def _():                       # write first partial directly (no zero-fill)
        acc_ref[...] = prod

    @pl.when(k > 0)
    def _():
        acc_ref[...] += prod

    @pl.when(k == pl.num_programs(1) - 1)
    def _():
        # bias + ReLU on the f32 accumulator (f32 VPU math rides in slack
        # under the MXU/DMA on all generations; keep it f32 even for bf16).
        h = jnp.maximum(acc_ref[...] + b_ref[...], 0.0)
        if has_next:
            o_ref[...] = jnp.dot(h.astype(w_next_ref.dtype), w_next_ref[...],
                                 preferred_element_type=jnp.float32
                                 ).astype(o_ref.dtype)
        else:
            o_ref[...] = h.astype(o_ref.dtype)


def _graph_conv_step(adj_c, support, bias, w_next, *, tm, tk, out_dtype,
                     vmem_limit):
    """One GCN layer: out = relu(adj @ support + b) [@ W_next if given]."""
    n = adj_c.shape[0]
    f_cur = support.shape[1]
    has_next = w_next is not None
    f_out = w_next.shape[1] if has_next else f_cur
    itemsize = jnp.dtype(support.dtype).itemsize

    # Keep support VMEM-resident for the whole grid when it fits the budget
    # (account for BlockSpec double-buffering); otherwise stream (tk, f) blocks.
    sup_resident = 2 * n * f_cur * itemsize <= vmem_limit // 3

    in_specs = [pl.BlockSpec((tm, tk), lambda i, k: (i, k))]
    if sup_resident:
        in_specs.append(pl.BlockSpec((n, f_cur), lambda i, k: (0, 0)))
    else:
        in_specs.append(pl.BlockSpec((tk, f_cur), lambda i, k: (k, 0)))
    in_specs.append(pl.BlockSpec((1, f_cur), lambda i, k: (0, 0)))

    args = [adj_c, support, jnp.reshape(bias, (1, f_cur)).astype(jnp.float32)]
    if has_next:
        in_specs.append(pl.BlockSpec((f_cur, f_out), lambda i, k: (0, 0)))
        args.append(w_next)

    return pl.pallas_call(
        functools.partial(_adj_layer_kernel, tk, sup_resident, has_next),
        out_shape=jax.ShapeDtypeStruct((n, f_out), out_dtype),
        grid=(n // tm, n // tk),
        in_specs=in_specs,
        out_specs=pl.BlockSpec((tm, f_out), lambda i, k: (i, 0)),
        scratch_shapes=[pltpu.VMEM((tm, f_cur), jnp.float32)],
        compiler_params=pltpu.CompilerParams(
            # row tiles parallel (v7x 2 TCs), reduction axis innermost/arbitrary
            dimension_semantics=("parallel", "arbitrary"),
            vmem_limit_bytes=vmem_limit,
        ),
    )(*args)


def _pick_tile(n):
    """Prefer 256-multiples (v6e/v7x MXU is 2x256^2); pad ragged n."""
    if n < 128:
        return max(8, ((n + 7) // 8) * 8)
    for c in (1024, 512, 256, 128):
        if c <= n and n % c == 0:
            return c
    for c in (512, 256, 128):                 # ragged: keep padding waste small
        if c <= n and (-(-n // c) * c) <= n + n // 8:
            return c
    return 128


def _gcn_tiled(inputs, adj, weights, biases, *, compute_dtype, tm, tk,
               vmem_limit):
    n = adj.shape[0]
    if tm is None or tk is None:
        t = _pick_tile(n)
        tm = tm or t
        tk = tk or t

    # Zero-pad to a tile multiple (pad rows/cols of adj are zero so they do
    # not perturb the real rows; pad rows of the output are sliced away).
    step = math.lcm(tm, tk)
    n_pad = -(-n // step) * step
    if n_pad != n:
        adj = jnp.pad(adj, ((0, n_pad - n), (0, n_pad - n)))
        x = jnp.pad(inputs, ((0, n_pad - n), (0, 0)))
    else:
        x = inputs

    adj_c = adj.astype(compute_dtype)          # cast once, reused every layer

    # support_0 = x @ W_0 (small, one launch); later supports come out of the
    # fused epilogue of the previous layer's adj-matmul kernel.
    support = _support_matmul(x, weights[0], tm=tm, compute_dtype=compute_dtype,
                              vmem_limit=vmem_limit)

    num_layers = len(weights)
    for l in range(num_layers):
        is_last = (l + 1 == num_layers)
        w_next = None if is_last else weights[l + 1].astype(compute_dtype)
        out_dtype = inputs.dtype if is_last else compute_dtype
        support = _graph_conv_step(adj_c, support, biases[l], w_next,
                                   tm=tm, tk=tk, out_dtype=out_dtype,
                                   vmem_limit=vmem_limit)
    return support[:n]


# ---------------------------------------------------------------------------
# Public forward: GCNLayer.forward (dropout layers are identity in eval mode).
# ---------------------------------------------------------------------------
def gcn_layer_forward(inputs, adj, weights, biases, *,
                      compute_dtype=None, fused=None, tm=None, tk=None):
    n = adj.shape[0]
    vmem_limit = _vmem_limit_bytes()

    if fused is None:
        # Fuse the whole stack when adj + activations + weights comfortably
        # fit VMEM (generation-aware budget, conservative f32 estimate).
        max_f = max([inputs.shape[1]] + [w.shape[1] for w in weights])
        est_bytes = 4 * (n * n + 3 * n * max_f + sum(w.size for w in weights))
        fused = est_bytes <= vmem_limit // 3

    if fused:
        cd = jnp.float32 if compute_dtype is None else compute_dtype
        return gcn_layer_fused(inputs, adj, weights, biases,
                               compute_dtype=cd, vmem_limit=vmem_limit)

    # Tiled path is HBM-bandwidth bound on adj -> default to bf16 operands
    # (f32 accumulation) to halve the streamed bytes.
    cd = jnp.bfloat16 if compute_dtype is None else compute_dtype
    return _gcn_tiled(inputs, adj, weights, biases, compute_dtype=cd,
                      tm=tm, tk=tk, vmem_limit=vmem_limit)


# ---------------------------------------------------------------------------
# Parameter init mirroring the PyTorch module, and a pure-JAX reference.
# ---------------------------------------------------------------------------
def init_gcn_params(key, num_nodes, hidden_size):
    num_layers = len(hidden_size) - 1
    keys = jax.random.split(key, 2 * num_layers + 1)
    limit = math.sqrt(6.0 / (2 * num_nodes))          # xavier_uniform_
    adj = jax.random.uniform(keys[0], (num_nodes, num_nodes), jnp.float32,
                             -limit, limit)
    weights, biases = [], []
    for li, (f_in, f_out) in enumerate(zip(hidden_size[:-1], hidden_size[1:])):
        stdv = 1.0 / math.sqrt(float(f_out))
        w = jax.random.uniform(keys[1 + 2 * li], (f_in, f_out), jnp.float32,
                               -stdv, stdv)
        b = jax.random.uniform(keys[2 + 2 * li], (f_out,), jnp.float32,
                               -stdv, stdv)
        weights.append(w)
        biases.append(b)
    return adj, weights, biases


def reference_forward(inputs, adj, weights, biases):
    out = inputs
    for w, b in zip(weights, biases):
        out = jnp.maximum(adj @ (out @ w) + b.reshape(1, -1), 0.0)
    return out


if __name__ == "__main__":
    key = jax.random.PRNGKey(0)
    k1, k2, k3, k4, k5, k6 = jax.random.split(key, 6)

    # --- tiny config matching the module spec: fused single-call path -------
    num_nodes = 8
    hidden = [32, 64, 32]      # GCNLayer(num_nodes=8, hidden_size=[32,64,32])
    adj, ws, bs = init_gcn_params(k1, num_nodes, hidden)
    x = jax.random.normal(k2, (num_nodes, hidden[0]), jnp.float32)

    out = jax.block_until_ready(gcn_layer_forward(x, adj, ws, bs))
    ref = reference_forward(x, adj, ws, bs)
    assert out.shape == (num_nodes, hidden[-1])
    assert jnp.allclose(out, ref, atol=1e-4, rtol=1e-4)

    # --- larger, lane-dense config exercising the tiled path (multi-step k
    #     reduction + fused next-layer epilogue), 256-multiple tiles ---------
    n2, hs2 = 512, [128, 256, 128]
    adj2, w2, b2 = init_gcn_params(k3, n2, hs2)
    x2 = jax.random.normal(k4, (n2, hs2[0]), jnp.float32)
    ref2 = reference_forward(x2, adj2, w2, b2)

    out2 = jax.block_until_ready(
        gcn_layer_forward(x2, adj2, w2, b2, fused=False,
                          compute_dtype=jnp.float32, tm=256, tk=256))
    assert out2.shape == (n2, hs2[-1])
    assert jnp.allclose(out2, ref2, atol=1e-3, rtol=1e-3)

    # default tiled dtype: bf16 adj/support, f32 accumulation (MXU fast path).
    out3 = jax.block_until_ready(
        gcn_layer_forward(x2, adj2, w2, b2, fused=False, tm=256, tk=256))
    assert jnp.allclose(out3, ref2, atol=1e-1, rtol=1e-1)

    # --- ragged node count: exercises padding + tail slicing ----------------
    n3, hs3 = 200, [64, 128, 64]
    adj3, w3, b3 = init_gcn_params(k5, n3, hs3)
    x3 = jax.random.normal(k6, (n3, hs3[0]), jnp.float32)
    ref3 = reference_forward(x3, adj3, w3, b3)
    out4 = jax.block_until_ready(
        gcn_layer_forward(x3, adj3, w3, b3, fused=False,
                          compute_dtype=jnp.float32))
    assert out4.shape == (n3, hs3[-1])
    assert jnp.allclose(out4, ref3, atol=1e-3, rtol=1e-3)

    print("KERNEL_OK")
</pallas_src>

<mosaic_0001>
module attributes {stable_mosaic.version = 11 : i64} {
  func.func @_fused_stack_kernel(%arg0: memref<8x32xf32, #tpu.memory_space<vmem>>, %arg1: memref<8x8xf32, #tpu.memory_space<vmem>>, %arg2: memref<32x64xf32, #tpu.memory_space<vmem>>, %arg3: memref<1x64xf32, #tpu.memory_space<vmem>>, %arg4: memref<64x32xf32, #tpu.memory_space<vmem>>, %arg5: memref<1x32xf32, #tpu.memory_space<vmem>>, %arg6: memref<8x32xf32, #tpu.memory_space<vmem>>) attributes {dimension_semantics = [], scalar_prefetch = 0 : i64, scratch_operands = 0 : i64, tpu.core_type = #tpu.core_type<tc>} {
    %c0 = arith.constant 0 : index
    %c0_0 = arith.constant 0 : index
    %0 = vector.load %arg1[%c0, %c0_0] : memref<8x8xf32, #tpu.memory_space<vmem>>, vector<8x8xf32>
    %c0_1 = arith.constant 0 : index
    %c0_2 = arith.constant 0 : index
    %1 = vector.load %arg0[%c0_1, %c0_2] : memref<8x32xf32, #tpu.memory_space<vmem>>, vector<8x32xf32>
    %c0_3 = arith.constant 0 : index
    %c0_4 = arith.constant 0 : index
    %2 = vector.load %arg2[%c0_3, %c0_4] : memref<32x64xf32, #tpu.memory_space<vmem>>, vector<32x64xf32>
    %cst = arith.constant dense<0.000000e+00> : vector<8x64xf32>
    %3 = tpu.matmul %1, %2, %cst {dimension_numbers = #tpu.dot_dimension_numbers<[1], [0], [0], [1], [0, 0, 1, 1], [], []>} : vector<8x32xf32>, vector<32x64xf32>, vector<8x64xf32> -> vector<8x64xf32>
    %cst_5 = arith.constant dense<0.000000e+00> : vector<8x64xf32>
    %4 = tpu.matmul %0, %3, %cst_5 {dimension_numbers = #tpu.dot_dimension_numbers<[1], [0], [0], [1], [0, 0, 1, 1], [], []>} : vector<8x8xf32>, vector<8x64xf32>, vector<8x64xf32> -> vector<8x64xf32>
    %c0_6 = arith.constant 0 : index
    %c0_7 = arith.constant 0 : index
    %5 = vector.load %arg3[%c0_6, %c0_7] : memref<1x64xf32, #tpu.memory_space<vmem>>, vector<1x64xf32>
    %6 = vector.broadcast %5 : vector<1x64xf32> to vector<8x64xf32>
    %7 = arith.addf %4, %6 : vector<8x64xf32>
    %cst_8 = arith.constant 0.000000e+00 : f32
    %8 = vector.broadcast %cst_8 : f32 to vector<8x64xf32>
    %9 = arith.maximumf %7, %8 : vector<8x64xf32>
    %c0_9 = arith.constant 0 : index
    %c0_10 = arith.constant 0 : index
    %10 = vector.load %arg4[%c0_9, %c0_10] : memref<64x32xf32, #tpu.memory_space<vmem>>, vector<64x32xf32>
    %cst_11 = arith.constant dense<0.000000e+00> : vector<8x32xf32>
    %11 = tpu.matmul %9, %10, %cst_11 {dimension_numbers = #tpu.dot_dimension_numbers<[1], [0], [0], [1], [0, 0, 1, 1], [], []>} : vector<8x64xf32>, vector<64x32xf32>, vector<8x32xf32> -> vector<8x32xf32>
    %cst_12 = arith.constant dense<0.000000e+00> : vector<8x32xf32>
    %12 = tpu.matmul %0, %11, %cst_12 {dimension_numbers = #tpu.dot_dimension_numbers<[1], [0], [0], [1], [0, 0, 1, 1], [], []>} : vector<8x8xf32>, vector<8x32xf32>, vector<8x32xf32> -> vector<8x32xf32>
    %c0_13 = arith.constant 0 : index
    %c0_14 = arith.constant 0 : index
    %13 = vector.load %arg5[%c0_13, %c0_14] : memref<1x32xf32, #tpu.memory_space<vmem>>, vector<1x32xf32>
    %14 = vector.broadcast %13 : vector<1x32xf32> to vector<8x32xf32>
    %15 = arith.addf %12, %14 : vector<8x32xf32>
    %cst_15 = arith.constant 0.000000e+00 : f32
    %16 = vector.broadcast %cst_15 : f32 to vector<8x32xf32>
    %17 = arith.maximumf %15, %16 : vector<8x32xf32>
    %c0_16 = arith.constant 0 : index
    %c0_17 = arith.constant 0 : index
    %18 = vector.load %arg6[%c0_16, %c0_17] : memref<8x32xf32, #tpu.memory_space<vmem>>, vector<8x32xf32>
    tpu.vector_store %arg6[%c0_16, %c0_17], %17 {strides = array<i32>} : memref<8x32xf32, #tpu.memory_space<vmem>>, vector<8x32xf32>,
    return
  }
}

</mosaic_0001>

<llo_original>
// kernel: tpu_custom_call.1
$region0: #{tpu_custom_call.1}
  #allocation0 [shape = 'u32[]', space=smem, size = 0x4, offset = 0x4, fixed_abs, tag = 'smem constant byte address 0x4 - core index']
  #allocation1 [shape = 'u32[144,128]{1,0:T(1,128)}', space=vmem, size = 0x12000, scoped, tag = 'internal scratch']
  %s0 = inlined_call_operand.vmem [shape: f32[8,32], index: 0, kind: input, shape index: {}]
  %s1 = inlined_call_operand.vmem [shape: f32[8,8], index: 1, kind: input, shape index: {}]
  %s2 = inlined_call_operand.vmem [shape: f32[32,64], index: 2, kind: input, shape index: {}]
  %s3 = inlined_call_operand.vmem [shape: f32[1,64], index: 3, kind: input, shape index: {}]
  %s4 = inlined_call_operand.vmem [shape: f32[64,32], index: 4, kind: input, shape index: {}]
  %s5 = inlined_call_operand.vmem [shape: f32[1,32], index: 5, kind: input, shape index: {}]
  %s6 = inlined_call_operand.hbm [shape: f32[8,32], index: 6, kind: output, shape index: {}]
  %s7 = sld [smem:[#allocation0]]
  $region34: #{tpu_custom_call.1} parent=0
    _
  %s9 = ssub.s32 1, %s7
  %s10 = scalar_select 0, %s9, %s7
  $region1: #{tpu_custom_call.1} parent=0
    #allocation2 [shape = 'u8[4096]{0}', space=vmem, size = 0x1000, scoped, tag = 'output window, operand 0, single buffered']
    #allocation3 [shape = 's32[1]{0}', space=sflag, size = 0x4, scoped, tag = 'scoped memory for tpu_custom_call.1']
    %11 = vsyncpa [#allocation3], 0
    // Predicated region
    $region2: #{tpu_custom_call.1} parent=1 // pred_check
      _
    $region3: #{tpu_custom_call.1} parent=1 // pred_check_branch
      %13 = sbr.rel (0) target = $region5
    $region4: #{tpu_custom_call.1} parent=1 // pred_region
      _
    $region5: #{tpu_custom_call.1} parent=1 // pred_fallthru
      _
    // Predicated region
    $region6: #{tpu_custom_call.1} parent=1 // pred_check
      _
    $region7: #{tpu_custom_call.1} parent=1 // pred_check_branch
      %15 = sbr.rel (0) target = $region9
    $region8: #{tpu_custom_call.1} parent=1 // pred_region
      _
    $region9: #{tpu_custom_call.1} parent=1 // pred_fallthru
      _
    // Predicated region
    $region10: #{tpu_custom_call.1} parent=1 // pred_check
      _
    $region11: #{tpu_custom_call.1} parent=1 // pred_check_branch
      %17 = sbr.rel (0) target = $region13
    $region12: #{tpu_custom_call.1} parent=1 // pred_region
      _
    $region13: #{tpu_custom_call.1} parent=1 // pred_fallthru
      _
    // Predicated region
    $region14: #{tpu_custom_call.1} parent=1 // pred_check
      _
    $region15: #{tpu_custom_call.1} parent=1 // pred_check_branch
      %19 = sbr.rel (0) target = $region17
    $region16: #{tpu_custom_call.1} parent=1 // pred_region
      _
    $region17: #{tpu_custom_call.1} parent=1 // pred_fallthru
      _
    // Predicated region
    $region18: #{tpu_custom_call.1} parent=1 // pred_check
      _
    $region19: #{tpu_custom_call.1} parent=1 // pred_check_branch
      %21 = sbr.rel (0) target = $region21
    $region20: #{tpu_custom_call.1} parent=1 // pred_region
      _
    $region21: #{tpu_custom_call.1} parent=1 // pred_fallthru
      _
    // Predicated region
    $region22: #{tpu_custom_call.1} parent=1 // pred_check
      _
    $region23: #{tpu_custom_call.1} parent=1 // pred_check_branch
      %23 = sbr.rel (0) target = $region25
    $region24: #{tpu_custom_call.1} parent=1 // pred_region
      _
    $region25: #{tpu_custom_call.1} parent=1 // pred_fallthru
      _
    %v24 = vld [vmem:[%s1] sm:$0xff]
    %v25 = vld [vmem:[%s0] sm:$0xff]
    %v26 = vld [vmem:[%s2] sm:$0xff]
    %v27 = vld [vmem:[%s2 + $0x8] sm:$0xff]
    %v28 = vld [vmem:[%s2 + $0x10] sm:$0xff]
    %v29 = vld [vmem:[%s2 + $0x18] sm:$0xff]
    %vm30 = vcmask 261120
    %v32 = vsel %vm30, %v25, 0
    %34 = vmatprep.subr.mxu0 0.0
    %35 = vmatpush1.msra.mxu0 %v26
    %36 = vmatprep.subr.mxu0 0.0
    %37 = vmatpush1.msra.mxu0 %v27
    %38 = vmatprep.subr.mxu0 0.0
    %39 = vmatpush1.msra.mxu0 %v28
    %40 = vmatprep.subr.mxu0 0.0
    %41 = vmatpush1.msra.mxu0 %v29
    %42 = vmatprep.subr.mxu0 0.0
    %43 = vmatpush1.msra.mxu0 0.0
    %44 = vmatprep.subr.mxu0 0.0
    %45 = vmatpush1.msra.mxu0 0.0
    %46 = vmatprep.subr.mxu0 0.0
    %47 = vmatpush1.msra.mxu0 0.0
    %48 = vmatprep.subr.mxu0 0.0
    %49 = vmatpush1.msra.mxu0 0.0
    %50 = vmatprep.subr.mxu0 0.0
    %51 = vmatpush1.msra.mxu0 0.0
    %52 = vmatprep.subr.mxu0 0.0
    %53 = vmatpush1.msra.mxu0 0.0
    %54 = vmatprep.subr.mxu0 0.0
    %55 = vmatpush1.msra.mxu0 0.0
    %56 = vmatprep.subr.mxu0 0.0
    %57 = vmatpush1.msra.mxu0 0.0
    %58 = vmatprep.subr.mxu0 0.0
    %59 = vmatpush1.msra.mxu0 0.0
    %60 = vmatprep.subr.mxu0 0.0
    %61 = vmatpush1.msra.mxu0 0.0
    %62 = vmatprep.subr.mxu0 0.0
    %63 = vmatpush1.msra.mxu0 0.0
    %64 = vmatprep.subr.mxu0 0.0
    %65 = vmatpush1.msra.mxu0 0.0
    %66 = vmatprep.subr.mxu0 0.0
    %67 = vmatpush1.msra.mxu0 0.0
    %68 = vmatprep.subr.mxu0 0.0
    %69 = vmatpush1.msra.mxu0 0.0
    %70 = vmatprep.subr.mxu0 0.0
    %71 = vmatpush1.msra.mxu0 0.0
    %72 = vmatprep.subr.mxu0 0.0
    %73 = vmatpush1.msra.mxu0 0.0
    %74 = vmatprep.subr.mxu0 0.0
    %75 = vmatpush1.msra.mxu0 0.0
    %76 = vmatprep.subr.mxu0 0.0
    %77 = vmatpush1.msra.mxu0 0.0
    %78 = vmatprep.subr.mxu0 0.0
    %79 = vmatpush1.msra.mxu0 0.0
    %80 = vmatprep.subr.mxu0 0.0
    %81 = vmatpush1.msra.mxu0 0.0
    %82 = vmatprep.subr.mxu0 0.0
    %83 = vmatpush1.msra.mxu0 0.0
    %84 = vmatprep.subr.mxu0 0.0
    %85 = vmatpush1.msra.mxu0 0.0
    %86 = vmatprep.subr.mxu0 0.0
    %87 = vmatpush1.msra.mxu0 0.0
    %88 = vmatprep.subr.mxu0 0.0
    %89 = vmatpush1.msra.mxu0 0.0
    %90 = vmatprep.subr.mxu0 0.0
    %91 = vmatpush1.msra.mxu0 0.0
    %92 = vmatprep.subr.mxu0 0.0
    %93 = vmatpush1.msra.mxu0 0.0
    %94 = vmatprep.subr.mxu0 0.0
    %95 = vmatpush1.msra.mxu0 0.0
    %96 = vmatprep.subr.mxu0 0.0
    %97 = vmatpush1.msra.mxu0 0.0
    %98 = vmatprep.mubr.f32.mxu0 0.0
    %99 = vmatmul.mubr.f32.gmra.mrb[0].mxu0 %v32
    %v100 = vpop.f32.mrb[0].mxu0
    %v101 = vadd.f32 0.0, %v100
    %v102 = vpop.f32.mrb[0].mxu0
    %103 = vdwg.mxu0
    %v104 = vld [vmem:[%s3] sm:$0x1]
    %v106 = vlaneseq
    %v107 = vshrl.u32 %v106, 7
    %v108 = vsub.s32 0, %v107
    %v109 = vrot.slane %v104, %v108
    %vm111 = vcmask 64512
    %v113 = vsel %vm111, %v24, 0
    %115 = vmatprep.subr.mxu0 0.0
    %116 = vmatpush1.msra.mxu0 %v101
    %117 = vmatprep.subr.mxu0 0.0
    %118 = vmatpush1.msra.mxu0 0.0
    %119 = vmatprep.subr.mxu0 0.0
    %120 = vmatpush1.msra.mxu0 0.0
    %121 = vmatprep.subr.mxu0 0.0
    %122 = vmatpush1.msra.mxu0 0.0
    %123 = vmatprep.subr.mxu0 0.0
    %124 = vmatpush1.msra.mxu0 0.0
    %125 = vmatprep.subr.mxu0 0.0
    %126 = vmatpush1.msra.mxu0 0.0
    %127 = vmatprep.subr.mxu0 0.0
    %128 = vmatpush1.msra.mxu0 0.0
    %129 = vmatprep.subr.mxu0 0.0
    %130 = vmatpush1.msra.mxu0 0.0
    %131 = vmatprep.subr.mxu0 0.0
    %132 = vmatpush1.msra.mxu0 0.0
    %133 = vmatprep.subr.mxu0 0.0
    %134 = vmatpush1.msra.mxu0 0.0
    %135 = vmatprep.subr.mxu0 0.0
    %136 = vmatpush1.msra.mxu0 0.0
    %137 = vmatprep.subr.mxu0 0.0
    %138 = vmatpush1.msra.mxu0 0.0
    %139 = vmatprep.subr.mxu0 0.0
    %140 = vmatpush1.msra.mxu0 0.0
    %141 = vmatprep.subr.mxu0 0.0
    %142 = vmatpush1.msra.mxu0 0.0
    %143 = vmatprep.subr.mxu0 0.0
    %144 = vmatpush1.msra.mxu0 0.0
    %145 = vmatprep.subr.mxu0 0.0
    %146 = vmatpush1.msra.mxu0 0.0
    %147 = vmatprep.subr.mxu0 0.0
    %148 = vmatpush1.msra.mxu0 0.0
    %149 = vmatprep.subr.mxu0 0.0
    %150 = vmatpush1.msra.mxu0 0.0
    %151 = vmatprep.subr.mxu0 0.0
    %152 = vmatpush1.msra.mxu0 0.0
    %153 = vmatprep.subr.mxu0 0.0
    %154 = vmatpush1.msra.mxu0 0.0
    %155 = vmatprep.subr.mxu0 0.0
    %156 = vmatpush1.msra.mxu0 0.0
    %157 = vmatprep.subr.mxu0 0.0
    %158 = vmatpush1.msra.mxu0 0.0
    %159 = vmatprep.subr.mxu0 0.0
    %160 = vmatpush1.msra.mxu0 0.0
    %161 = vmatprep.subr.mxu0 0.0
    %162 = vmatpush1.msra.mxu0 0.0
    %163 = vmatprep.subr.mxu0 0.0
    %164 = vmatpush1.msra.mxu0 0.0
    %165 = vmatprep.subr.mxu0 0.0
    %166 = vmatpush1.msra.mxu0 0.0
    %167 = vmatprep.subr.mxu0 0.0
    %168 = vmatpush1.msra.mxu0 0.0
    %169 = vmatprep.subr.mxu0 0.0
    %170 = vmatpush1.msra.mxu0 0.0
    %171 = vmatprep.subr.mxu0 0.0
    %172 = vmatpush1.msra.mxu0 0.0
    %173 = vmatprep.subr.mxu0 0.0
    %174 = vmatpush1.msra.mxu0 0.0
    %175 = vmatprep.subr.mxu0 0.0
    %176 = vmatpush1.msra.mxu0 0.0
    %177 = vmatprep.subr.mxu0 0.0
    %178 = vmatpush1.msra.mxu0 0.0
    %179 = vmatprep.mubr.f32.mxu0 0.0
    %180 = vmatmul.mubr.f32.gmra.mrb[0].mxu0 %v113
    %v181 = vpop.f32.mrb[0].mxu0
    %v182 = vadd.f32 %v109, %v181
    %v183 = vpop.f32.mrb[0].mxu0
    %184 = vdwg.mxu0
    %v185 = vmax.f32 %v182, 0.0
    %v186 = vld [vmem:[%s4] sm:$0xff]
    %v187 = vld [vmem:[%s4 + $0x8] sm:$0xff]
    %v188 = vld [vmem:[%s4 + $0x10] sm:$0xff]
    %v189 = vld [vmem:[%s4 + $0x18] sm:$0xff]
    %v190 = vld [vmem:[%s4 + $0x20] sm:$0xff]
    %v191 = vld [vmem:[%s4 + $0x28] sm:$0xff]
    %v192 = vld [vmem:[%s4 + $0x30] sm:$0xff]
    %v193 = vld [vmem:[%s4 + $0x38] sm:$0xff]
    %vm194 = vcmask 523264
    %v196 = vsel %vm194, %v185, 0
    %198 = vmatprep.subr.mxu0 0.0
    %199 = vmatpush1.msra.mxu0 %v186
    %200 = vmatprep.subr.mxu0 0.0
    %201 = vmatpush1.msra.mxu0 %v187
    %202 = vmatprep.subr.mxu0 0.0
    %203 = vmatpush1.msra.mxu0 %v188
    %204 = vmatprep.subr.mxu0 0.0
    %205 = vmatpush1.msra.mxu0 %v189
    %206 = vmatprep.subr.mxu0 0.0
    %207 = vmatpush1.msra.mxu0 %v190
    %208 = vmatprep.subr.mxu0 0.0
    %209 = vmatpush1.msra.mxu0 %v191
    %210 = vmatprep.subr.mxu0 0.0
    %211 = vmatpush1.msra.mxu0 %v192
    %212 = vmatprep.subr.mxu0 0.0
    %213 = vmatpush1.msra.mxu0 %v193
    %214 = vmatprep.subr.mxu0 0.0
    %215 = vmatpush1.msra.mxu0 0.0
    %216 = vmatprep.subr.mxu0 0.0
    %217 = vmatpush1.msra.mxu0 0.0
    %218 = vmatprep.subr.mxu0 0.0
    %219 = vmatpush1.msra.mxu0 0.0
    %220 = vmatprep.subr.mxu0 0.0
    %221 = vmatpush1.msra.mxu0 0.0
    %222 = vmatprep.subr.mxu0 0.0
    %223 = vmatpush1.msra.mxu0 0.0
    %224 = vmatprep.subr.mxu0 0.0
    %225 = vmatpush1.msra.mxu0 0.0
    %226 = vmatprep.subr.mxu0 0.0
    %227 = vmatpush1.msra.mxu0 0.0
    %228 = vmatprep.subr.mxu0 0.0
    %229 = vmatpush1.msra.mxu0 0.0
    %230 = vmatprep.subr.mxu0 0.0
    %231 = vmatpush1.msra.mxu0 0.0
    %232 = vmatprep.subr.mxu0 0.0
    %233 = vmatpush1.msra.mxu0 0.0
    %234 = vmatprep.subr.mxu0 0.0
    %235 = vmatpush1.msra.mxu0 0.0
    %236 = vmatprep.subr.mxu0 0.0
    %237 = vmatpush1.msra.mxu0 0.0
    %238 = vmatprep.subr.mxu0 0.0
    %239 = vmatpush1.msra.mxu0 0.0
    %240 = vmatprep.subr.mxu0 0.0
    %241 = vmatpush1.msra.mxu0 0.0
    %242 = vmatprep.subr.mxu0 0.0
    %243 = vmatpush1.msra.mxu0 0.0
    %244 = vmatprep.subr.mxu0 0.0
    %245 = vmatpush1.msra.mxu0 0.0
    %246 = vmatprep.subr.mxu0 0.0
    %247 = vmatpush1.msra.mxu0 0.0
    %248 = vmatprep.subr.mxu0 0.0
    %249 = vmatpush1.msra.mxu0 0.0
    %250 = vmatprep.subr.mxu0 0.0
    %251 = vmatpush1.msra.mxu0 0.0
    %252 = vmatprep.subr.mxu0 0.0
    %253 = vmatpush1.msra.mxu0 0.0
    %254 = vmatprep.subr.mxu0 0.0
    %255 = vmatpush1.msra.mxu0 0.0
    %256 = vmatprep.subr.mxu0 0.0
    %257 = vmatpush1.msra.mxu0 0.0
    %258 = vmatprep.subr.mxu0 0.0
    %259 = vmatpush1.msra.mxu0 0.0
    %260 = vmatprep.subr.mxu0 0.0
    %261 = vmatpush1.msra.mxu0 0.0
    %262 = vmatprep.mubr.f32.mxu0 0.0
    %263 = vmatmul.mubr.f32.gmra.mrb[0].mxu0 %v196
    %v264 = vpop.f32.mrb[0].mxu0
    %v265 = vadd.f32 0.0, %v264
    %v266 = vpop.f32.mrb[0].mxu0
    %267 = vdwg.mxu0
    %v268 = vld [vmem:[%s5] sm:$0x1]
    %v270 = vlaneseq
    %v271 = vshrl.u32 %v270, 7
    %v272 = vsub.s32 0, %v271
    %v273 = vrot.slane %v268, %v272
    %275 = vmatprep.subr.mxu0 0.0
    %276 = vmatpush1.msra.mxu0 %v265
    %277 = vmatprep.subr.mxu0 0.0
    %278 = vmatpush1.msra.mxu0 0.0
    %279 = vmatprep.subr.mxu0 0.0
    %280 = vmatpush1.msra.mxu0 0.0
    %281 = vmatprep.subr.mxu0 0.0
    %282 = vmatpush1.msra.mxu0 0.0
    %283 = vmatprep.subr.mxu0 0.0
    %284 = vmatpush1.msra.mxu0 0.0
    %285 = vmatprep.subr.mxu0 0.0
    %286 = vmatpush1.msra.mxu0 0.0
    %287 = vmatprep.subr.mxu0 0.0
    %288 = vmatpush1.msra.mxu0 0.0
    %289 = vmatprep.subr.mxu0 0.0
    %290 = vmatpush1.msra.mxu0 0.0
    %291 = vmatprep.subr.mxu0 0.0
    %292 = vmatpush1.msra.mxu0 0.0
    %293 = vmatprep.subr.mxu0 0.0
    %294 = vmatpush1.msra.mxu0 0.0
    %295 = vmatprep.subr.mxu0 0.0
    %296 = vmatpush1.msra.mxu0 0.0
    %297 = vmatprep.subr.mxu0 0.0
    %298 = vmatpush1.msra.mxu0 0.0
    %299 = vmatprep.subr.mxu0 0.0
    %300 = vmatpush1.msra.mxu0 0.0
    %301 = vmatprep.subr.mxu0 0.0
    %302 = vmatpush1.msra.mxu0 0.0
    %303 = vmatprep.subr.mxu0 0.0
    %304 = vmatpush1.msra.mxu0 0.0
    %305 = vmatprep.subr.mxu0 0.0
    %306 = vmatpush1.msra.mxu0 0.0
    %307 = vmatprep.subr.mxu0 0.0
    %308 = vmatpush1.msra.mxu0 0.0
    %309 = vmatprep.subr.mxu0 0.0
    %310 = vmatpush1.msra.mxu0 0.0
    %311 = vmatprep.subr.mxu0 0.0
    %312 = vmatpush1.msra.mxu0 0.0
    %313 = vmatprep.subr.mxu0 0.0
    %314 = vmatpush1.msra.mxu0 0.0
    %315 = vmatprep.subr.mxu0 0.0
    %316 = vmatpush1.msra.mxu0 0.0
    %317 = vmatprep.subr.mxu0 0.0
    %318 = vmatpush1.msra.mxu0 0.0
    %319 = vmatprep.subr.mxu0 0.0
    %320 = vmatpush1.msra.mxu0 0.0
    %321 = vmatprep.subr.mxu0 0.0
    %322 = vmatpush1.msra.mxu0 0.0
    %323 = vmatprep.subr.mxu0 0.0
    %324 = vmatpush1.msra.mxu0 0.0
    %325 = vmatprep.subr.mxu0 0.0
    %326 = vmatpush1.msra.mxu0 0.0
    %327 = vmatprep.subr.mxu0 0.0
    %328 = vmatpush1.msra.mxu0 0.0
    %329 = vmatprep.subr.mxu0 0.0
    %330 = vmatpush1.msra.mxu0 0.0
    %331 = vmatprep.subr.mxu0 0.0
    %332 = vmatpush1.msra.mxu0 0.0
    %333 = vmatprep.subr.mxu0 0.0
    %334 = vmatpush1.msra.mxu0 0.0
    %335 = vmatprep.subr.mxu0 0.0
    %336 = vmatpush1.msra.mxu0 0.0
    %337 = vmatprep.subr.mxu0 0.0
    %338 = vmatpush1.msra.mxu0 0.0
    %339 = vmatprep.mubr.f32.mxu0 0.0
    %340 = vmatmul.mubr.f32.gmra.mrb[0].mxu0 %v113
    %v341 = vpop.f32.mrb[0].mxu0
    %v342 = vadd.f32 %v273, %v341
    %v343 = vpop.f32.mrb[0].mxu0
    %344 = vdwg.mxu0
    %v345 = vmax.f32 %v342, 0.0
    %346 = vst.msk [vmem:[#allocation2] sm:$0xff] %vm30, %v345
    // Predicated region
    $region26: #{tpu_custom_call.1} parent=1 // pred_check
      _
    $region27: #{tpu_custom_call.1} parent=1 // pred_check_branch
      %348 = sbr.rel (0) target = $region29
    $region28: #{tpu_custom_call.1} parent=1 // pred_region
      %s350 = ssub.s32 128, 128
      %351 = vsyncadd [#allocation3], %s350
      %s353 = sshll.u32 [#allocation2], 4
      %s354 = int_to_ptr.vmem [resolvable:$true] %s353
      %356 = dma.vmem_to_hbm [thread:$0]  %s354, 128, %s6, [#allocation3]
    $region29: #{tpu_custom_call.1} parent=1 // pred_fallthru
      _
    // Predicated region
    $region30: #{tpu_custom_call.1} parent=1 // pred_check
      _
    $region31: #{tpu_custom_call.1} parent=1 // pred_check_branch
      %358 = sbr.rel (0) target = $region33
    $region32: #{tpu_custom_call.1} parent=1 // pred_region
      %359 = dma.done [#allocation3], 128
    $region33: #{tpu_custom_call.1} parent=1 // pred_fallthru
      _
    %360 = vsyncpa [#allocation3], 1

</llo_original>
